<compile_context>
chip_gen: v7x
topology: tpu7x:2x2x1
jax: 0.10.0
libtpu: 0.0.40
codegen_flags: <defaults>
</compile_context>

<pallas_src>
import functools

import jax
import jax.numpy as jnp
import numpy as np
from jax import lax
from jax.experimental import pallas as pl
from jax.experimental.pallas import tpu as pltpu


# ---------------------------------------------------------------------------
# Kernels
# ---------------------------------------------------------------------------
def _recon_loss_kernel_full_d(pred_ref, gt_ref, out_ref, *, l2_weight,
                              lane_dense_out):
    """Full reduction dim resident in one block: per-row sum of squared error."""
    diff = pred_ref[...].astype(jnp.float32) - gt_ref[...].astype(jnp.float32)
    row = l2_weight * jnp.sum(diff * diff, axis=-1, keepdims=True)   # (tn, 1)
    if lane_dense_out:
        # (tn, 1) -> (1, tn): sublane->lane relayout goes to the XLU, which is
        # idle here, and turns the HBM write-back into unmasked lane-dense vst.
        out_ref[...] = row.T.astype(out_ref.dtype)
    else:
        out_ref[...] = row.astype(out_ref.dtype)


def _recon_loss_kernel_split_d(pred_ref, gt_ref, out_ref, *, l2_weight,
                               d_total, td, lane_dense_out):
    """Reduction dim split over grid axis 1; accumulate into resident out block."""
    k = pl.program_id(1)

    @pl.when(k == 0)
    def _():
        out_ref[...] = jnp.zeros_like(out_ref)

    diff = pred_ref[...].astype(jnp.float32) - gt_ref[...].astype(jnp.float32)
    sq = diff * diff

    def _accumulate(row_sum):
        contrib = l2_weight * row_sum                     # (tn, 1)
        if lane_dense_out:
            out_ref[...] += contrib.T                     # (1, tn)
        else:
            out_ref[...] += contrib

    if d_total % td == 0:
        # No tail block -> pure streaming on every step.
        _accumulate(jnp.sum(sq, axis=-1, keepdims=True))
    else:
        # Only the LAST D block contains out-of-bounds (garbage) lanes.  Gate
        # the iota/cmp/select mask behind pl.when so all other grid steps stay
        # pure streaming (no VPU filler, no extra vreg pressure).
        is_last = k == pl.num_programs(1) - 1

        @pl.when(jnp.logical_not(is_last))
        def _():
            _accumulate(jnp.sum(sq, axis=-1, keepdims=True))

        @pl.when(is_last)
        def _():
            lane = lax.broadcasted_iota(jnp.int32, sq.shape, dimension=1) + k * td
            masked = jnp.where(lane < d_total, sq, 0.0)
            _accumulate(jnp.sum(masked, axis=-1, keepdims=True))


# ---------------------------------------------------------------------------
# Wrapper helpers
# ---------------------------------------------------------------------------
def _round_up(x, m):
    return ((x + m - 1) // m) * m


def _cdiv(a, b):
    return (a + b - 1) // b


def _row_multiple(dtype):
    """Native sublane packing of the dtype: f32 -> 8, bf16 -> 16, int8/fp8 -> 32."""
    bits = jnp.dtype(dtype).itemsize * 8
    if bits >= 32:
        return 8
    if bits == 16:
        return 16
    return 32


def _vmem_budgets():
    """Generation-aware (pipeline budget, vmem_limit) in bytes.

    v5e/v6e have 128 MiB physical VMEM -> use big tiles (~85% of HBM roofline
    needs >=512-row tiles).  v7x has 64 MiB physical -> keep the conservative
    24/48 MiB split.  Falls back to the v7x-safe values if the query fails.
    """
    cap = 64 * 1024 * 1024
    try:
        info = pltpu.get_tpu_info()
        c = getattr(info, "vmem_capacity_bytes", None)
        if c:
            cap = int(c)
    except Exception:
        pass
    if cap >= 96 * 1024 * 1024:      # 128-MiB parts (v5e / v6e)
        return 56 * 1024 * 1024, 100 * 1024 * 1024, True
    return 24 * 1024 * 1024, 48 * 1024 * 1024, False


def _input_spec(block_shape, index_map, bufs):
    """BlockSpec with optional deeper multi-buffering (v5e/v6e only)."""
    if bufs and bufs > 2 and hasattr(pl, "Buffered"):
        try:
            return pl.BlockSpec(block_shape, index_map,
                                pipeline_mode=pl.Buffered(bufs))
        except TypeError:
            pass
    return pl.BlockSpec(block_shape, index_map)


def _out_layout(tn, N):
    """Pick a lane-dense (1, N) output when the block shape is legal, else (N, 1)."""
    lane_dense = (tn % 128 == 0) or (tn == N)
    if lane_dense:
        return True, jax.ShapeDtypeStruct((1, N), jnp.float32), (1, tn)
    return False, jax.ShapeDtypeStruct((N, 1), jnp.float32), (tn, 1)


# ---------------------------------------------------------------------------
# Wrapper
# ---------------------------------------------------------------------------
def recon_loss(pred_flow, gt_flow, l2_weight=1.0, block_d=None):
    """Pallas implementation of ReconLoss.forward.

    Args:
      pred_flow: [B, S, H, W, 1, C]  (dim 4 is the singleton removed by
                 torch.squeeze(pred_flow, 4) in the reference module)
      gt_flow:   [B, S, H, W, C]
      l2_weight: scalar weight.
      block_d:   optional explicit D tile (rounded to a multiple of 128) to
                 force the split-D accumulation path (testing / very large D).

    Returns:
      [B, S] float32 per-(batch, step) summed squared error * l2_weight.
    """
    pred = jnp.squeeze(pred_flow, axis=4)          # [B, S, H, W, C]
    assert pred.shape == gt_flow.shape, (pred.shape, gt_flow.shape)
    B, S = pred.shape[0], pred.shape[1]
    N = B * S
    D = int(np.prod(pred.shape[2:]))

    # Pure metadata reshapes (contiguous) -- no HBM copies, no padding, and no
    # dtype casts: bf16 inputs stay bf16 on the wire (kernel accumulates in f32).
    pred2 = pred.reshape(N, D)
    gt2 = gt_flow.reshape(N, D)

    itemsize_sum = pred2.dtype.itemsize + gt2.dtype.itemsize
    PIPE_BUDGET, VMEM_LIMIT, big_vmem = _vmem_budgets()

    row_mult = max(_row_multiple(pred2.dtype), _row_multiple(gt2.dtype))
    n_pad = _round_up(N, row_mult)
    l2w = float(l2_weight)

    cost = pl.CostEstimate(
        flops=3 * N * D,
        transcendentals=0,
        bytes_accessed=N * D * itemsize_sum + 4 * N,
    )

    use_split_d = (block_d is not None) or (2 * row_mult * D * itemsize_sum > PIPE_BUDGET)

    if not use_split_d:
        # --- Path A: full-extent D block (no lane padding needed) ------------
        tn = (PIPE_BUDGET // (2 * D * itemsize_sum)) // row_mult * row_mult
        tn = max(tn, row_mult)
        # Guarantee >= 2 row blocks so the "parallel" axis is sharded across
        # both v7x TensorCores (one extra ~0.35us grid step on 1-TC parts).
        if N >= 2 * row_mult:
            tn = min(tn, _round_up(_cdiv(N, 2), row_mult))
        tn = min(tn, 1024, n_pad)
        if tn >= 128:
            tn = (tn // 128) * 128   # aligned rows + legal lane-dense out block
        tn = int(tn)

        lane_dense, out_shape, out_block = _out_layout(tn, N)

        # Correctness note: tail row blocks (when tn does not divide N) read
        # garbage rows; the reduction is strictly per-row, so garbage only
        # feeds output rows/lanes beyond N, which Pallas drops on write-back.
        kernel = functools.partial(_recon_loss_kernel_full_d,
                                   l2_weight=l2w, lane_dense_out=lane_dense)
        out = pl.pallas_call(
            kernel,
            out_shape=out_shape,
            grid_spec=pltpu.PrefetchScalarGridSpec(
                num_scalar_prefetch=0,
                grid=(_cdiv(N, tn),),
                in_specs=[
                    pl.BlockSpec((tn, D), lambda i: (i, 0)),
                    pl.BlockSpec((tn, D), lambda i: (i, 0)),
                ],
                out_specs=pl.BlockSpec(
                    out_block,
                    (lambda i: (0, i)) if lane_dense else (lambda i: (i, 0))),
            ),
            compiler_params=pltpu.CompilerParams(
                dimension_semantics=("parallel",),
                vmem_limit_bytes=VMEM_LIMIT),
            cost_estimate=cost,
        )(pred2, gt2)
    else:
        # --- Path B: split the reduction dim over a trailing grid axis -------
        bufs = 3 if big_vmem else 2   # deeper pipeline only where VMEM allows
        tn_cap = 256 if big_vmem else 64
        tn = min(n_pad, _round_up(tn_cap, row_mult))
        tn = max(tn, row_mult)
        if N >= 2 * row_mult:
            tn = min(tn, _round_up(_cdiv(N, 2), row_mult))
        if tn >= 128:
            tn = (tn // 128) * 128
        tn = int(tn)

        d_pad = _round_up(D, 128)
        if block_d is not None:
            # Validate/round user-supplied tile: must be a multiple of 128 to
            # satisfy the (8,128) lane-tiling constraint.
            td = min(max(128, _round_up(int(block_d), 128)), d_pad)
        else:
            td_budget = (PIPE_BUDGET // (bufs * tn * itemsize_sum)) // 128 * 128
            td_budget = max(128, td_budget)
            td = None
            if D % 128 == 0 and td_budget < D:
                # Prefer a tile that divides D (no tail mask at all), but only
                # if it doesn't shrink the tile below half the budget.
                for cand in range(min(td_budget, D), max(127, td_budget // 2), -128):
                    if D % cand == 0:
                        td = cand
                        break
            if td is None:
                td = min(td_budget, d_pad)
        td = int(td)

        lane_dense, out_shape, out_block = _out_layout(tn, N)

        kernel = functools.partial(_recon_loss_kernel_split_d,
                                   l2_weight=l2w, d_total=D, td=td,
                                   lane_dense_out=lane_dense)
        out = pl.pallas_call(
            kernel,
            out_shape=out_shape,
            grid_spec=pltpu.PrefetchScalarGridSpec(
                num_scalar_prefetch=0,
                grid=(_cdiv(N, tn), _cdiv(D, td)),
                in_specs=[
                    _input_spec((tn, td), lambda i, k: (i, k), bufs),
                    _input_spec((tn, td), lambda i, k: (i, k), bufs),
                ],
                # Output block constant across the D (reduction) axis -> resident
                # accumulator, zero-initialized under pl.when(k == 0).
                out_specs=pl.BlockSpec(
                    out_block,
                    (lambda i, k: (0, i)) if lane_dense else (lambda i, k: (i, 0))),
            ),
            compiler_params=pltpu.CompilerParams(
                dimension_semantics=("parallel", "arbitrary"),
                vmem_limit_bytes=VMEM_LIMIT),
            cost_estimate=cost,
        )(pred2, gt2)

    return out.reshape(B, S)   # (N,1) and (1,N) flatten to the same row order


# ---------------------------------------------------------------------------
# Self-test
# ---------------------------------------------------------------------------
if __name__ == "__main__":
    # Small shapes consistent with the module: B=2 sequences, S=8 steps,
    # 16x16 spatial, 3-channel flow; the model emits a trailing singleton at
    # dim 4 which forward() squeezes away.
    B, S, H, W, C = 2, 8, 16, 16, 3
    key = jax.random.PRNGKey(0)
    k1, k2 = jax.random.split(key)

    pred_flow = jax.random.normal(k1, (B, S, H, W, 1, C), dtype=jnp.float32)
    gt_flow = jax.random.normal(k2, (B, S, H, W, C), dtype=jnp.float32)
    l2_weight = 1.0

    # Pure-JAX reference (mirrors the PyTorch semantics exactly).
    pred_ref = jnp.squeeze(pred_flow, axis=4)
    ref = (l2_weight * (pred_ref - gt_flow) ** 2).reshape(B, S, -1).sum(-1)

    # Path A (full-D block, the common/fast path).
    loss = recon_loss(pred_flow, gt_flow, l2_weight=l2_weight)
    loss = jax.block_until_ready(loss)
    np.testing.assert_allclose(np.asarray(loss), np.asarray(ref),
                               rtol=1e-5, atol=1e-4)
    assert loss.shape == (B, S)

    # Path B (split-D accumulation with a non-dividing, gated tail block),
    # forced via block_d to exercise the large-D code path on small shapes.
    loss_split = recon_loss(pred_flow, gt_flow, l2_weight=l2_weight, block_d=512)
    loss_split = jax.block_until_ready(loss_split)
    np.testing.assert_allclose(np.asarray(loss_split), np.asarray(ref),
                               rtol=1e-5, atol=1e-4)
    assert loss_split.shape == (B, S)

    print("KERNEL_OK")
</pallas_src>

<mosaic_0001>
module attributes {stable_mosaic.version = 11 : i64} {
  func.func @_recon_loss_kernel_full_d(%arg0: i32, %arg1: memref<8x768xf32, #tpu.memory_space<vmem>>, %arg2: memref<8x768xf32, #tpu.memory_space<vmem>>, %arg3: memref<8x1xf32, #tpu.memory_space<vmem>>) attributes {dimension_semantics = [#tpu.dimension_semantics<parallel>], iteration_bounds = array<i64: 2>, scalar_prefetch = 0 : i64, scratch_operands = 0 : i64, tpu.core_type = #tpu.core_type<tc>, window_params = [{transform_indices = @transform_0, window_bounds = array<i64: 8, 768>}, {transform_indices = @transform_1, window_bounds = array<i64: 8, 768>}, {transform_indices = @transform_2, window_bounds = array<i64: 8, 1>}]} {
    %c0 = arith.constant 0 : index
    %c0_0 = arith.constant 0 : index
    %0 = vector.load %arg1[%c0, %c0_0] : memref<8x768xf32, #tpu.memory_space<vmem>>, vector<8x768xf32>
    %c0_1 = arith.constant 0 : index
    %c0_2 = arith.constant 0 : index
    %1 = vector.load %arg2[%c0_1, %c0_2] : memref<8x768xf32, #tpu.memory_space<vmem>>, vector<8x768xf32>
    %2 = arith.subf %0, %1 : vector<8x768xf32>
    %3 = arith.mulf %2, %2 : vector<8x768xf32>
    %cst = arith.constant dense<0.000000e+00> : vector<8xf32>
    %4 = vector.multi_reduction <add>, %3, %cst [1] : vector<8x768xf32> to vector<8xf32>
    %5 = vector.shape_cast %4 : vector<8xf32> to vector<8x1xf32>
    %cst_3 = arith.constant 1.000000e+00 : f32
    %6 = vector.broadcast %cst_3 : f32 to vector<8x1xf32>
    %7 = arith.mulf %6, %5 : vector<8x1xf32>
    %c0_4 = arith.constant 0 : index
    %c0_5 = arith.constant 0 : index
    %8 = vector.load %arg3[%c0_4, %c0_5] : memref<8x1xf32, #tpu.memory_space<vmem>>, vector<8x1xf32>
    tpu.vector_store %arg3[%c0_4, %c0_5], %7 {strides = array<i32>} : memref<8x1xf32, #tpu.memory_space<vmem>>, vector<8x1xf32>,
    return
  }
  func.func @transform_0(%arg0: i32) -> (i32, i32) {
    %c0_i32 = arith.constant 0 : i32
    %c0_i32_0 = arith.constant 0 : i32
    return %arg0, %c0_i32 : i32, i32
  }
  func.func @transform_1(%arg0: i32) -> (i32, i32) {
    %c0_i32 = arith.constant 0 : i32
    %c0_i32_0 = arith.constant 0 : i32
    return %arg0, %c0_i32 : i32, i32
  }
  func.func @transform_2(%arg0: i32) -> (i32, i32) {
    %c0_i32 = arith.constant 0 : i32
    %c0_i32_0 = arith.constant 0 : i32
    return %arg0, %c0_i32 : i32, i32
  }
}

</mosaic_0001>

<llo_original>
// kernel: tpu_custom_call.1
$region0: #{tpu_custom_call.1}
  #allocation0 [shape = 'u32[]', space=smem, size = 0x4, offset = 0x4, fixed_abs, tag = 'smem constant byte address 0x4 - core index']
  #allocation1 [shape = 'u32[144,128]{1,0:T(1,128)}', space=vmem, size = 0x12000, scoped, tag = 'internal scratch']
  %s0 = inlined_call_operand.hbm [shape: f32[16,768], index: 0, kind: input, shape index: {}]
  %s1 = inlined_call_operand.hbm [shape: f32[16,768], index: 1, kind: input, shape index: {}]
  %s2 = inlined_call_operand.vmem [shape: f32[16,1], index: 2, kind: output, shape index: {}]
  %s3 = sld [smem:[#allocation0]]
  $region49: #{tpu_custom_call.1} parent=0
    _
  %s5 = ssub.s32 1, %s3
  %s6 = scalar_select 0, %s5, %s3
  $region1: #{tpu_custom_call.1} parent=0
    #allocation2 [shape = 'u8[49152]{0}', space=vmem, size = 0xc000, scoped, tag = 'input window, operand 0']
    #allocation3 [shape = 's32[2]{0}', space=sflag, size = 0x8, scoped, tag = 'scoped memory for tpu_custom_call.1']
    #allocation4 [shape = 'u8[49152]{0}', space=vmem, size = 0xc000, scoped, tag = 'input window, operand 1']
    #allocation5 [shape = 's32[2]{0}', space=sflag, size = 0x8, scoped, tag = 'scoped memory for tpu_custom_call.1']
    %7 = vsyncpa [#allocation3], 0
    %s8 = scalar_lea.sflag [#allocation3], 1
    %9 = vsyncpa %s8, 0
    %10 = vsyncpa [#allocation5], 0
    %s11 = scalar_lea.sflag [#allocation5], 1
    %12 = vsyncpa %s11, 0
    loop: start=0, step=1, limit=4
    $region2: #{tpu_custom_call.1} parent=1 // loop_pre_header
      _
    $region3: #{tpu_custom_call.1} parent=1 // loop_header
      %s14 = sphi 0, %s18
      %p15 = scmp.ge.s32.totalorder %s14, 4
      %s24 = sphi 0, %s26
      %s27 = sphi 0, %s24
      %s28 = sphi 0, %s27
      %s44 = sphi 0, %s28
      %s50 = sphi 0, %s52
      %s53 = sphi 0, %s50
      %s54 = sphi 0, %s53
      %s70 = sphi 0, %s54
      %s76 = sphi 0, %s78
      %s79 = sphi 0, %s76
      %s80 = sphi 0, %s79
      %s96 = sphi 0, %s80
    $region4: #{tpu_custom_call.1} parent=1 // loop_header_branch
      %17 = sbr.rel (%p15) target = $region8
    $region5: #{tpu_custom_call.1} parent=1 // loop_body
      %s19 = ssub.s32 %s14, 1
      %s20 = ssub.s32 %s14, 2
      %s21 = sadd.s32 %s14, 1
      %s22 = ssub.s32 %s14, %s21
      %p23 = scmp.eq.s32.totalorder %s22, 0
      %s25 = sadd.s32 %s24, 1
      %s26 = scalar_select %p23, %s24, %s25
      %p29 = pneg %p23
      %p30 = scmp.eq.s32.totalorder %s14, 1
      %p31 = por %p29, %p30
      %p32 = scmp.ne.s32.totalorder %s24, %s27
      %p33 = scmp.eq.s32.totalorder %s14, 0
      %p34 = por %p32, %p33
      %p35 = scmp.ne.s32.totalorder %s24, %s27
      %p36 = scmp.eq.s32.totalorder %s19, 1
      %p37 = por %p35, %p36
      %p38 = scmp.ne.s32.totalorder %s27, %s28
      %p39 = scmp.eq.s32.totalorder %s19, 0
      %p40 = por %p38, %p39
      %p41 = scmp.ne.s32.totalorder %s27, %s28
      %p42 = scmp.eq.s32.totalorder %s20, 1
      %p43 = por %p41, %p42
      %p45 = scmp.ne.s32.totalorder %s28, %s44
      %p46 = scmp.eq.s32.totalorder %s20, 0
      %p47 = por %p45, %p46
      %s48 = ssub.s32 %s14, %s21
      %p49 = scmp.eq.s32.totalorder %s48, 0
      %s51 = sadd.s32 %s50, 1
      %s52 = scalar_select %p49, %s50, %s51
      %p55 = pneg %p49
      %p56 = scmp.eq.s32.totalorder %s14, 1
      %p57 = por %p55, %p56
      %p58 = scmp.ne.s32.totalorder %s50, %s53
      %p59 = scmp.eq.s32.totalorder %s14, 0
      %p60 = por %p58, %p59
      %p61 = scmp.ne.s32.totalorder %s50, %s53
      %p62 = scmp.eq.s32.totalorder %s19, 1
      %p63 = por %p61, %p62
      %p64 = scmp.ne.s32.totalorder %s53, %s54
      %p65 = scmp.eq.s32.totalorder %s19, 0
      %p66 = por %p64, %p65
      %p67 = scmp.ne.s32.totalorder %s53, %s54
      %p68 = scmp.eq.s32.totalorder %s20, 1
      %p69 = por %p67, %p68
      %p71 = scmp.ne.s32.totalorder %s54, %s70
      %p72 = scmp.eq.s32.totalorder %s20, 0
      %p73 = por %p71, %p72
      %s74 = ssub.s32 %s14, %s21
      %p75 = scmp.eq.s32.totalorder %s74, 0
      %s77 = sadd.s32 %s76, 1
      %s78 = scalar_select %p75, %s76, %s77
      %p81 = pneg %p75
      %p82 = scmp.eq.s32.totalorder %s14, 1
      %p83 = por %p81, %p82
      %p84 = scmp.ne.s32.totalorder %s76, %s79
      %p85 = scmp.eq.s32.totalorder %s14, 0
      %p86 = por %p84, %p85
      %p87 = scmp.ne.s32.totalorder %s76, %s79
      %p88 = scmp.eq.s32.totalorder %s19, 1
      %p89 = por %p87, %p88
      %p90 = scmp.ne.s32.totalorder %s79, %s80
      %p91 = scmp.eq.s32.totalorder %s19, 0
      %p92 = por %p90, %p91
      %p93 = scmp.ne.s32.totalorder %s79, %s80
      %p94 = scmp.eq.s32.totalorder %s20, 1
      %p95 = por %p93, %p94
      %p97 = scmp.ne.s32.totalorder %s80, %s96
      %p98 = scmp.eq.s32.totalorder %s20, 0
      %p99 = por %p97, %p98
      %p100 = scmp.le.s32.totalorder 1, %s14
      %p101 = scmp.lt.s32.totalorder %s14, 3
      %p102 = pnand %p100, %p101
      %p103 = pneg %p102
      // Predicated region
      $region9: #{tpu_custom_call.1} parent=5 // pred_check
        _
      $region10: #{tpu_custom_call.1} parent=5 // pred_check_branch
        %105 = sbr.rel (%p102) target = $region12
      $region11: #{tpu_custom_call.1} parent=5 // pred_region
        %s106 = ssub.s32 %s14, 1
      $region12: #{tpu_custom_call.1} parent=5 // pred_fallthru
        _
      %p107 = scmp.lt.s32.totalorder %s14, 2
      // Predicated region
      $region13: #{tpu_custom_call.1} parent=5 // pred_check
        %p108 = pneg %p107
      $region14: #{tpu_custom_call.1} parent=5 // pred_check_branch
        %110 = sbr.rel (%p108) target = $region16
      $region15: #{tpu_custom_call.1} parent=5 // pred_region
        // Predicated region
        $region17: #{tpu_custom_call.1} parent=15 // pred_check
          %p111 = pneg %p34
        $region18: #{tpu_custom_call.1} parent=15 // pred_check_branch
          %113 = sbr.rel (%p111) target = $region20
        $region19: #{tpu_custom_call.1} parent=15 // pred_region
          %s114 = sand.u32 %s24, 1
          %s115 = scalar_lea.sflag [#allocation3], %s114
          %s116 = sand.u32 %s24, 1
          %s117 = smul.addr %s116, 48
          %s118 = scalar_lea.vmem [#allocation2], %s117
          %s120 = ssub.s32 768, 768
          %121 = vsyncadd %s115, %s120
          %s122 = smul.addr %s14, 6
          %s123 = smul.addr %s122, 128
          %s124 = scalar_lea.hbm %s0, %s123
          %s126 = sshll.u32 %s118, 4
          %s127 = int_to_ptr.vmem [resolvable:$true] %s126
          %129 = dma.hbm_to_vmem [thread:$0]  %s124, 768, %s127, %s115
        $region20: #{tpu_custom_call.1} parent=15 // pred_fallthru
          _
        // Predicated region
        $region21: #{tpu_custom_call.1} parent=15 // pred_check
          %p130 = pneg %p60
        $region22: #{tpu_custom_call.1} parent=15 // pred_check_branch
          %132 = sbr.rel (%p130) target = $region24
        $region23: #{tpu_custom_call.1} parent=15 // pred_region
          %s133 = sand.u32 %s50, 1
          %s134 = scalar_lea.sflag [#allocation5], %s133
          %s135 = sand.u32 %s50, 1
          %s136 = smul.addr %s135, 48
          %s137 = scalar_lea.vmem [#allocation4], %s136
          %s139 = ssub.s32 768, 768
          %140 = vsyncadd %s134, %s139
          %s141 = smul.addr %s14, 6
          %s142 = smul.addr %s141, 128
          %s143 = scalar_lea.hbm %s1, %s142
          %s145 = sshll.u32 %s137, 4
          %s146 = int_to_ptr.vmem [resolvable:$true] %s145
          %148 = dma.hbm_to_vmem [thread:$0]  %s143, 768, %s146, %s134
        $region24: #{tpu_custom_call.1} parent=15 // pred_fallthru
          _
      $region16: #{tpu_custom_call.1} parent=5 // pred_fallthru
        _
      %p149 = scmp.le.s32.totalorder 1, %s14
      %p150 = scmp.lt.s32.totalorder %s14, 3
      %p151 = pnand %p149, %p150
      %p152 = pneg %p151
      // Predicated region
      $region25: #{tpu_custom_call.1} parent=5 // pred_check
        _
      $region26: #{tpu_custom_call.1} parent=5 // pred_check_branch
        %154 = sbr.rel (%p151) target = $region28
      $region27: #{tpu_custom_call.1} parent=5 // pred_region
        %s155 = ssub.s32 %s14, 1
        %s156 = sand.u32 %s27, 1
        %s157 = scalar_lea.sflag [#allocation3], %s156
        %s158 = sand.u32 %s27, 1
        %s159 = smul.addr %s158, 48
        %s160 = scalar_lea.vmem [#allocation2], %s159
        // Predicated region
        $region29: #{tpu_custom_call.1} parent=27 // pred_check
          %p161 = pneg %p40
        $region30: #{tpu_custom_call.1} parent=27 // pred_check_branch
          %163 = sbr.rel (%p161) target = $region32
        $region31: #{tpu_custom_call.1} parent=27 // pred_region
          %164 = dma.done %s157, 768
        $region32: #{tpu_custom_call.1} parent=27 // pred_fallthru
          _
        %s165 = sand.u32 %s53, 1
        %s166 = scalar_lea.sflag [#allocation5], %s165
        %s167 = sand.u32 %s53, 1
        %s168 = smul.addr %s167, 48
        %s169 = scalar_lea.vmem [#allocation4], %s168
        // Predicated region
        $region33: #{tpu_custom_call.1} parent=27 // pred_check
          %p170 = pneg %p66
        $region34: #{tpu_custom_call.1} parent=27 // pred_check_branch
          %172 = sbr.rel (%p170) target = $region36
        $region35: #{tpu_custom_call.1} parent=27 // pred_region
          %173 = dma.done %s166, 768
        $region36: #{tpu_custom_call.1} parent=27 // pred_fallthru
          _
        %s174 = sand.u32 %s27, 1
        %s175 = scalar_lea.sflag [#allocation3], %s174
        %s176 = sand.u32 %s27, 1
        %s177 = smul.addr %s176, 48
        %s178 = scalar_lea.vmem [#allocation2], %s177
        %p179 = pneg %p40
        %p180 = pneg %p37
        %s181 = sand.u32 %s53, 1
        %s182 = scalar_lea.sflag [#allocation5], %s181
        %s183 = sand.u32 %s53, 1
        %s184 = smul.addr %s183, 48
        %s185 = scalar_lea.vmem [#allocation4], %s184
        %p186 = pneg %p66
        %p187 = pneg %p63
        %p188 = pneg %p92
        %p189 = pneg %p89
        %p190 = scmp.lt.s32.totalorder %s19, 1
        %s191 = scalar_select %p190, %s19, 1
        %s192 = smul.addr %s191, 8
        %s193 = scalar_lea.vmem %s2, %s192
        %p194 = scmp.lt.s32.totalorder %s19, 1
        %s195 = scalar_select %p194, %s19, 1
        %s196 = smul.addr %s195, 8
        %s197 = scalar_lea.vmem %s2, %s196
        %v198 = vld [vmem:[%s160] sm:$0xff]
        %v199 = vld [vmem:[%s160 + $0x8] sm:$0xff]
        %v200 = vld [vmem:[%s160 + $0x10] sm:$0xff]
        %v201 = vld [vmem:[%s160 + $0x18] sm:$0xff]
        %v202 = vld [vmem:[%s160 + $0x20] sm:$0xff]
        %v203 = vld [vmem:[%s160 + $0x28] sm:$0xff]
        %v204 = vld [vmem:[%s169] sm:$0xff]
        %v205 = vld [vmem:[%s169 + $0x8] sm:$0xff]
        %v206 = vld [vmem:[%s169 + $0x10] sm:$0xff]
        %v207 = vld [vmem:[%s169 + $0x18] sm:$0xff]
        %v208 = vld [vmem:[%s169 + $0x20] sm:$0xff]
        %v209 = vld [vmem:[%s169 + $0x28] sm:$0xff]
        %v210 = vsub.f32 %v198, %v204
        %v211 = vsub.f32 %v199, %v205
        %v212 = vsub.f32 %v200, %v206
        %v213 = vsub.f32 %v201, %v207
        %v214 = vsub.f32 %v202, %v208
        %v215 = vsub.f32 %v203, %v209
        %v216 = vmul.f32 %v210, %v210
        %v217 = vmul.f32 %v211, %v211
        %v218 = vmul.f32 %v212, %v212
        %v219 = vmul.f32 %v213, %v213
        %v220 = vmul.f32 %v214, %v214
        %v221 = vmul.f32 %v215, %v215
        %v222 = vadd.f32 %v216, %v217
        %v223 = vadd.f32 %v222, %v218
        %v224 = vadd.f32 %v223, %v219
        %v225 = vadd.f32 %v224, %v220
        %v226 = vadd.f32 %v225, %v221
        %227 = vadd.xlane.f32.xlu0 %v226
        %v228 = vpop.xlane.xlu0 %227
        %vm229 = vcmask 7168
        %230 = vst.msk [vmem:[%s197] sm:$0xff] %vm229, %v228
        %p231 = scmp.lt.s32.totalorder %s19, 1
        %s232 = scalar_select %p231, %s19, 1
        %s233 = smul.addr %s232, 8
        %s234 = scalar_lea.vmem %s2, %s233
        // Predicated region
        $region37: #{tpu_custom_call.1} parent=27 // pred_check
          %p235 = pneg %p89
        $region38: #{tpu_custom_call.1} parent=27 // pred_check_branch
          %237 = sbr.rel (%p235) target = $region40
        $region39: #{tpu_custom_call.1} parent=27 // pred_region
          _
        $region40: #{tpu_custom_call.1} parent=27 // pred_fallthru
          _
      $region28: #{tpu_custom_call.1} parent=5 // pred_fallthru
        _
      %p238 = scmp.le.s32.totalorder 2, %s14
      // Predicated region
      $region41: #{tpu_custom_call.1} parent=5 // pred_check
        %p239 = pneg %p238
      $region42: #{tpu_custom_call.1} parent=5 // pred_check_branch
        %241 = sbr.rel (%p239) target = $region44
      $region43: #{tpu_custom_call.1} parent=5 // pred_region
        %s242 = ssub.s32 %s14, 2
        // Predicated region
        $region45: #{tpu_custom_call.1} parent=43 // pred_check
          %p243 = pneg %p95
        $region46: #{tpu_custom_call.1} parent=43 // pred_check_branch
          %245 = sbr.rel (%p243) target = $region48
        $region47: #{tpu_custom_call.1} parent=43 // pred_region
          %p246 = scmp.lt.s32.totalorder %s20, 1
          %s247 = scalar_select %p246, %s20, 1
          %s248 = smul.addr %s247, 8
          %s249 = scalar_lea.vmem %s2, %s248
        $region48: #{tpu_custom_call.1} parent=43 // pred_fallthru
          _
      $region44: #{tpu_custom_call.1} parent=5 // pred_fallthru
        _
    $region6: #{tpu_custom_call.1} parent=1 // loop_footer
      %s18 = sadd.s32 1, %s14
    $region7: #{tpu_custom_call.1} parent=1 // loop_footer_branch
      %13 = sbr.rel target = $region3
    $region8: #{tpu_custom_call.1} parent=1 // loop_exit
      _
    %250 = vsyncpa [#allocation3], 1
    %s251 = scalar_lea.sflag [#allocation3], 1
    %252 = vsyncpa %s251, 1
    %253 = vsyncpa [#allocation5], 1
    %s254 = scalar_lea.sflag [#allocation5], 1
    %255 = vsyncpa %s254, 1

</llo_original>
